<compile_context>
chip_gen: v7x
topology: tpu7x:2x2x1
jax: 0.10.0
libtpu: 0.0.40
codegen_flags: <defaults>
</compile_context>

<pallas_src>
import functools

import jax
import jax.numpy as jnp
from jax.experimental import pallas as pl
from jax.experimental.pallas import tpu as pltpu

LANE = 128  # TPU lane width: minimum unmasked-store width for the output slab


def _cdiv(a, b):
    return -(-a // b)


def _round_up(n, m):
    return _cdiv(n, m) * m


def _mish(x):
    # mish(x) = x * tanh(softplus(x)) = x * (u^2 + 2u) / (u^2 + 2u + 2), u=e^x.
    # Clamp before exp so u^2 cannot overflow f32; for |x|>20 the identity is
    # already saturated, so clamping does not change the result meaningfully.
    u = jnp.exp(jnp.clip(x, -20.0, 20.0))
    n = u * (u + 2.0)
    # approx reciprocal rides the EUP slot nearly for free (~1e-4 rel. error).
    return x * n * pl.reciprocal(n + 2.0, approx=True)


def _mlp_kernel(x_ref, w1_ref, b1_ref, w2_ref, b2_ref, w3_ref, b3_ref, o_ref):
    # MXU operands in bf16 (single-pass matmuls on v5e/v6e/v7x); accumulation,
    # bias adds and Mish strictly in f32 (v5e has no bf16 VPU/EUP).
    x = x_ref[...].astype(jnp.bfloat16)

    h1 = jnp.dot(x, w1_ref[...], preferred_element_type=jnp.float32) + b1_ref[...]
    h1 = _mish(h1)

    h2 = jnp.dot(h1.astype(jnp.bfloat16), w2_ref[...],
                 preferred_element_type=jnp.float32) + b2_ref[...]
    h2 = _mish(h2)

    y = jnp.dot(h2.astype(jnp.bfloat16), w3_ref[...],
                preferred_element_type=jnp.float32) + b3_ref[...]
    # Lane-dense (TB, 128) store -> unmasked vst; wrapper slices off pad cols.
    o_ref[...] = y.astype(o_ref.dtype)


def _choose_tiling(B, tb):
    """Pick (batch_tile, padded_batch, grid_steps) for the 1-D batch grid."""
    Bp8 = _round_up(B, 8)                 # sublane alignment
    steps = _cdiv(Bp8, tb)                # as few serial grid steps as possible
    if Bp8 >= 1024:
        # Enough work to amortize an extra ~0.35us step: make sure both v7x
        # TensorCores get tiles on the "parallel" batch axis.
        steps = max(steps, 2)
    if steps > 1 and steps % 2:
        steps += 1                        # balanced split across 2 TCs
    TB = _round_up(_cdiv(Bp8, steps), 8)
    return TB, TB * steps, steps


@functools.partial(jax.jit, static_argnames=("tb",))
def network_forward(x, params, *, tb=4096):
    """Fused MLP forward pass in a single Pallas kernel, batch-tiled.

    x: [B, obs_dim] float32
    params: dict with w1 [obs,H], b1 [1,H], w2 [H,H], b2 [1,H],
            w3 [H,A], b3 [1,A]   (weights already transposed to [in, out])
    returns: [B, action_dim] float32
    """
    B, obs = x.shape
    H = params["w1"].shape[1]
    A = params["w3"].shape[1]
    Ap = _round_up(A, LANE)               # lane-dense output width

    TB, Bp, steps = _choose_tiling(B, tb)
    if Bp != B:
        x = jnp.pad(x, ((0, Bp - B), (0, 0)))

    # bf16 MXU weights; last layer zero-padded to 128 output columns.
    # (In production these would be pre-cast/pre-padded in the param dict;
    #  here they are tiny (<=32x128) so the per-call cost is negligible.)
    w1 = params["w1"].astype(jnp.bfloat16)
    w2 = params["w2"].astype(jnp.bfloat16)
    w3 = jnp.pad(params["w3"], ((0, 0), (0, Ap - A))).astype(jnp.bfloat16)
    b1 = params["b1"].astype(jnp.float32)
    b2 = params["b2"].astype(jnp.float32)
    b3 = jnp.pad(params["b3"], ((0, 0), (0, Ap - A))).astype(jnp.float32)

    const = lambda shape: pl.BlockSpec(shape, lambda i: (0, 0))

    flops = 2 * Bp * (obs * H + H * H + H * Ap) + 6 * Bp * H + 2 * Bp * Ap
    transcendentals = 4 * Bp * H          # exp + approx-recip, 2 hidden layers
    bytes_accessed = (4 * Bp * obs + 4 * Bp * Ap
                      + 2 * (obs * H + H * H + H * Ap) + 4 * (2 * H + Ap))

    out = pl.pallas_call(
        _mlp_kernel,
        out_shape=jax.ShapeDtypeStruct((Bp, Ap), jnp.float32),
        grid=(steps,),
        in_specs=[
            pl.BlockSpec((TB, obs), lambda i: (i, 0)),      # x: walks the batch
            const(w1.shape), const(b1.shape),               # weights/biases stay
            const(w2.shape), const(b2.shape),               # VMEM-resident
            const(w3.shape), const(b3.shape),
        ],
        out_specs=pl.BlockSpec((TB, Ap), lambda i: (i, 0)),
        compiler_params=pltpu.CompilerParams(
            dimension_semantics=("parallel",)),             # 2x on v7x
        cost_estimate=pl.CostEstimate(
            flops=flops,
            transcendentals=transcendentals,
            bytes_accessed=bytes_accessed),
    )(x, w1, b1, w2, b2, w3, b3)

    return out[:B, :A]
    # TODO(synk): if hidden_size is ever scaled up, pad H to the MXU tile
    # (128 on v5e, 256 on v6e/v7x) once in the param dict (not per call) and
    # do NOT zero-pad activations through Mish (it multiplies EUP exp work).


def init_params(key, obs_dim, action_dim, hidden_size):
    """Deterministic init mimicking nn.Linear default (uniform +-1/sqrt(fan_in))."""
    ks = jax.random.split(key, 6)

    def lin(kw, kb, fan_in, fan_out):
        bound = 1.0 / jnp.sqrt(fan_in)
        # stored as [in, out] (transposed relative to PyTorch's [out, in])
        w = jax.random.uniform(kw, (fan_in, fan_out), jnp.float32, -bound, bound)
        b = jax.random.uniform(kb, (1, fan_out), jnp.float32, -bound, bound)
        return w, b

    w1, b1 = lin(ks[0], ks[1], obs_dim, hidden_size)
    w2, b2 = lin(ks[2], ks[3], hidden_size, hidden_size)
    w3, b3 = lin(ks[4], ks[5], hidden_size, action_dim)
    return {"w1": w1, "b1": b1, "w2": w2, "b2": b2, "w3": w3, "b3": b3}


def _reference_forward(x, p):
    def mish(v):
        return v * jnp.tanh(jnp.logaddexp(v, 0.0))  # exact mish, f32 throughout
    h = mish(x @ p["w1"] + p["b1"])
    h = mish(h @ p["w2"] + p["b2"])
    return h @ p["w3"] + p["b3"]


if __name__ == "__main__":
    key = jax.random.PRNGKey(0)
    k1, k2, k3, kp = jax.random.split(key, 4)

    obs_dim = 4
    action_dim = 2
    hidden_size = 32
    params = init_params(kp, obs_dim, action_dim, hidden_size)

    # Tolerance is loose vs the exact f32 reference because the kernel uses
    # bf16 MXU operands (f32 accumulation) and pl.reciprocal(approx=True) in
    # Mish; combined error is ~1e-2 absolute at these magnitudes.
    TOL = 5e-2

    # B=8   : single grid step, no padding.
    # B=500 : single grid step, padded to 504 rows (sublane alignment).
    # B=2048: 2 grid steps (TB=1024) -> exercises the multi-step / v7x path.
    for kk, batch in ((k1, 8), (k2, 500), (k3, 2048)):
        x = jax.random.normal(kk, (batch, obs_dim), jnp.float32)
        out = jax.block_until_ready(network_forward(x, params))
        ref = _reference_forward(x, params)
        assert out.shape == (batch, action_dim)
        assert jnp.allclose(out, ref, atol=TOL, rtol=TOL), (
            f"mismatch vs JAX reference (B={batch})")

    print("KERNEL_OK")
</pallas_src>

<mosaic_0001>
module attributes {stable_mosaic.version = 11 : i64} {
  func.func @_mlp_kernel(%arg0: i32, %arg1: memref<8x4xf32, #tpu.memory_space<vmem>>, %arg2: memref<4x32xbf16, #tpu.memory_space<vmem>>, %arg3: memref<1x32xf32, #tpu.memory_space<vmem>>, %arg4: memref<32x32xbf16, #tpu.memory_space<vmem>>, %arg5: memref<1x32xf32, #tpu.memory_space<vmem>>, %arg6: memref<32x128xbf16, #tpu.memory_space<vmem>>, %arg7: memref<1x128xf32, #tpu.memory_space<vmem>>, %arg8: memref<8x128xf32, #tpu.memory_space<vmem>>) attributes {dimension_semantics = [#tpu.dimension_semantics<parallel>], iteration_bounds = array<i64: 1>, scalar_prefetch = 0 : i64, scratch_operands = 0 : i64, tpu.core_type = #tpu.core_type<tc>, window_params = [{transform_indices = @transform_0, window_bounds = array<i64: 8, 4>}, {pipeline_mode = #tpu.pipeline_mode<synchronous>, transform_indices = @transform_1, window_bounds = array<i64: 4, 32>}, {pipeline_mode = #tpu.pipeline_mode<synchronous>, transform_indices = @transform_2, window_bounds = array<i64: 1, 32>}, {pipeline_mode = #tpu.pipeline_mode<synchronous>, transform_indices = @transform_3, window_bounds = array<i64: 32, 32>}, {pipeline_mode = #tpu.pipeline_mode<synchronous>, transform_indices = @transform_4, window_bounds = array<i64: 1, 32>}, {pipeline_mode = #tpu.pipeline_mode<synchronous>, transform_indices = @transform_5, window_bounds = array<i64: 32, 128>}, {pipeline_mode = #tpu.pipeline_mode<synchronous>, transform_indices = @transform_6, window_bounds = array<i64: 1, 128>}, {transform_indices = @transform_7, window_bounds = array<i64: 8, 128>}]} {
    %c0 = arith.constant 0 : index
    %c0_0 = arith.constant 0 : index
    %0 = vector.load %arg1[%c0, %c0_0] : memref<8x4xf32, #tpu.memory_space<vmem>>, vector<8x4xf32>
    %1 = arith.truncf %0 : vector<8x4xf32> to vector<8x4xbf16>
    %c0_1 = arith.constant 0 : index
    %c0_2 = arith.constant 0 : index
    %2 = vector.load %arg2[%c0_1, %c0_2] : memref<4x32xbf16, #tpu.memory_space<vmem>>, vector<4x32xbf16>
    %cst = arith.constant dense<0.000000e+00> : vector<8x32xf32>
    %3 = tpu.matmul %1, %2, %cst {dimension_numbers = #tpu.dot_dimension_numbers<[1], [0], [0], [1], [0, 0, 1, 1], [], []>} : vector<8x4xbf16>, vector<4x32xbf16>, vector<8x32xf32> -> vector<8x32xf32>
    %c0_3 = arith.constant 0 : index
    %c0_4 = arith.constant 0 : index
    %4 = vector.load %arg3[%c0_3, %c0_4] : memref<1x32xf32, #tpu.memory_space<vmem>>, vector<1x32xf32>
    %5 = vector.broadcast %4 : vector<1x32xf32> to vector<8x32xf32>
    %6 = arith.addf %3, %5 : vector<8x32xf32>
    %cst_5 = arith.constant -2.000000e+01 : f32
    %cst_6 = arith.constant 2.000000e+01 : f32
    %7 = vector.broadcast %cst_5 : f32 to vector<8x32xf32>
    %8 = arith.maximumf %7, %6 : vector<8x32xf32>
    %9 = vector.broadcast %cst_6 : f32 to vector<8x32xf32>
    %10 = arith.minimumf %9, %8 : vector<8x32xf32>
    %11 = math.exp %10 : vector<8x32xf32>
    %cst_7 = arith.constant 2.000000e+00 : f32
    %12 = vector.broadcast %cst_7 : f32 to vector<8x32xf32>
    %13 = arith.addf %11, %12 : vector<8x32xf32>
    %14 = arith.mulf %11, %13 : vector<8x32xf32>
    %15 = arith.mulf %6, %14 : vector<8x32xf32>
    %cst_8 = arith.constant 2.000000e+00 : f32
    %16 = vector.broadcast %cst_8 : f32 to vector<8x32xf32>
    %17 = arith.addf %14, %16 : vector<8x32xf32>
    %18 = tpu.reciprocal %17 {approx = true} : vector<8x32xf32> -> vector<8x32xf32>
    %19 = arith.mulf %15, %18 : vector<8x32xf32>
    %20 = arith.truncf %19 : vector<8x32xf32> to vector<8x32xbf16>
    %c0_9 = arith.constant 0 : index
    %c0_10 = arith.constant 0 : index
    %21 = vector.load %arg4[%c0_9, %c0_10] : memref<32x32xbf16, #tpu.memory_space<vmem>>, vector<32x32xbf16>
    %cst_11 = arith.constant dense<0.000000e+00> : vector<8x32xf32>
    %22 = tpu.matmul %20, %21, %cst_11 {dimension_numbers = #tpu.dot_dimension_numbers<[1], [0], [0], [1], [0, 0, 1, 1], [], []>} : vector<8x32xbf16>, vector<32x32xbf16>, vector<8x32xf32> -> vector<8x32xf32>
    %c0_12 = arith.constant 0 : index
    %c0_13 = arith.constant 0 : index
    %23 = vector.load %arg5[%c0_12, %c0_13] : memref<1x32xf32, #tpu.memory_space<vmem>>, vector<1x32xf32>
    %24 = vector.broadcast %23 : vector<1x32xf32> to vector<8x32xf32>
    %25 = arith.addf %22, %24 : vector<8x32xf32>
    %cst_14 = arith.constant -2.000000e+01 : f32
    %cst_15 = arith.constant 2.000000e+01 : f32
    %26 = vector.broadcast %cst_14 : f32 to vector<8x32xf32>
    %27 = arith.maximumf %26, %25 : vector<8x32xf32>
    %28 = vector.broadcast %cst_15 : f32 to vector<8x32xf32>
    %29 = arith.minimumf %28, %27 : vector<8x32xf32>
    %30 = math.exp %29 : vector<8x32xf32>
    %cst_16 = arith.constant 2.000000e+00 : f32
    %31 = vector.broadcast %cst_16 : f32 to vector<8x32xf32>
    %32 = arith.addf %30, %31 : vector<8x32xf32>
    %33 = arith.mulf %30, %32 : vector<8x32xf32>
    %34 = arith.mulf %25, %33 : vector<8x32xf32>
    %cst_17 = arith.constant 2.000000e+00 : f32
    %35 = vector.broadcast %cst_17 : f32 to vector<8x32xf32>
    %36 = arith.addf %33, %35 : vector<8x32xf32>
    %37 = tpu.reciprocal %36 {approx = true} : vector<8x32xf32> -> vector<8x32xf32>
    %38 = arith.mulf %34, %37 : vector<8x32xf32>
    %39 = arith.truncf %38 : vector<8x32xf32> to vector<8x32xbf16>
    %c0_18 = arith.constant 0 : index
    %c0_19 = arith.constant 0 : index
    %40 = vector.load %arg6[%c0_18, %c0_19] : memref<32x128xbf16, #tpu.memory_space<vmem>>, vector<32x128xbf16>
    %cst_20 = arith.constant dense<0.000000e+00> : vector<8x128xf32>
    %41 = tpu.matmul %39, %40, %cst_20 {dimension_numbers = #tpu.dot_dimension_numbers<[1], [0], [0], [1], [0, 0, 1, 1], [], []>} : vector<8x32xbf16>, vector<32x128xbf16>, vector<8x128xf32> -> vector<8x128xf32>
    %c0_21 = arith.constant 0 : index
    %c0_22 = arith.constant 0 : index
    %42 = vector.load %arg7[%c0_21, %c0_22] : memref<1x128xf32, #tpu.memory_space<vmem>>, vector<1x128xf32>
    %43 = vector.broadcast %42 : vector<1x128xf32> to vector<8x128xf32>
    %44 = arith.addf %41, %43 : vector<8x128xf32>
    %c0_23 = arith.constant 0 : index
    %c0_24 = arith.constant 0 : index
    %45 = vector.load %arg8[%c0_23, %c0_24] : memref<8x128xf32, #tpu.memory_space<vmem>>, vector<8x128xf32>
    tpu.vector_store %arg8[%c0_23, %c0_24], %44 {strides = array<i32>} : memref<8x128xf32, #tpu.memory_space<vmem>>, vector<8x128xf32>,
    return
  }
  func.func @transform_0(%arg0: i32) -> (i32, i32) {
    %c0_i32 = arith.constant 0 : i32
    %c0_i32_0 = arith.constant 0 : i32
    return %arg0, %c0_i32 : i32, i32
  }
  func.func @transform_1(%arg0: i32) -> (i32, i32) {
    %c0_i32 = arith.constant 0 : i32
    %c0_i32_0 = arith.constant 0 : i32
    %c0_i32_1 = arith.constant 0 : i32
    return %c0_i32, %c0_i32_0 : i32, i32
  }
  func.func @transform_2(%arg0: i32) -> (i32, i32) {
    %c0_i32 = arith.constant 0 : i32
    %c0_i32_0 = arith.constant 0 : i32
    %c0_i32_1 = arith.constant 0 : i32
    return %c0_i32, %c0_i32_0 : i32, i32
  }
  func.func @transform_3(%arg0: i32) -> (i32, i32) {
    %c0_i32 = arith.constant 0 : i32
    %c0_i32_0 = arith.constant 0 : i32
    %c0_i32_1 = arith.constant 0 : i32
    return %c0_i32, %c0_i32_0 : i32, i32
  }
  func.func @transform_4(%arg0: i32) -> (i32, i32) {
    %c0_i32 = arith.constant 0 : i32
    %c0_i32_0 = arith.constant 0 : i32
    %c0_i32_1 = arith.constant 0 : i32
    return %c0_i32, %c0_i32_0 : i32, i32
  }
  func.func @transform_5(%arg0: i32) -> (i32, i32) {
    %c0_i32 = arith.constant 0 : i32
    %c0_i32_0 = arith.constant 0 : i32
    %c0_i32_1 = arith.constant 0 : i32
    return %c0_i32, %c0_i32_0 : i32, i32
  }
  func.func @transform_6(%arg0: i32) -> (i32, i32) {
    %c0_i32 = arith.constant 0 : i32
    %c0_i32_0 = arith.constant 0 : i32
    %c0_i32_1 = arith.constant 0 : i32
    return %c0_i32, %c0_i32_0 : i32, i32
  }
  func.func @transform_7(%arg0: i32) -> (i32, i32) {
    %c0_i32 = arith.constant 0 : i32
    %c0_i32_0 = arith.constant 0 : i32
    return %arg0, %c0_i32 : i32, i32
  }
}

</mosaic_0001>

<llo_original>
// kernel: network_forward.1
$region0: #{network_forward.1}
  #allocation0 [shape = 'u32[]', space=smem, size = 0x4, offset = 0x4, fixed_abs, tag = 'smem constant byte address 0x4 - core index']
  #allocation1 [shape = 'u32[144,128]{1,0:T(1,128)}', space=vmem, size = 0x12000, scoped, tag = 'internal scratch']
  %s0 = inlined_call_operand.vmem [shape: f32[8,4], index: 0, kind: input, shape index: {}]
  %s1 = inlined_call_operand.vmem [shape: bf16[4,32], index: 1, kind: input, shape index: {}]
  %s2 = inlined_call_operand.vmem [shape: f32[1,32], index: 2, kind: input, shape index: {}]
  %s3 = inlined_call_operand.vmem [shape: bf16[32,32], index: 3, kind: input, shape index: {}]
  %s4 = inlined_call_operand.vmem [shape: f32[1,32], index: 4, kind: input, shape index: {}]
  %s5 = inlined_call_operand.vmem [shape: bf16[32,128], index: 5, kind: input, shape index: {}]
  %s6 = inlined_call_operand.vmem [shape: f32[1,128], index: 6, kind: input, shape index: {}]
  %s7 = inlined_call_operand.vmem [shape: f32[8,128], index: 7, kind: output, shape index: {}]
  %s8 = sld [smem:[#allocation0]]
  $region38: #{network_forward.1} parent=0
    _
  %s10 = ssub.s32 1, %s8
  %s11 = scalar_select 0, %s10, %s8
  // Predicated region
  $region2: #{network_forward.1} parent=0 // pred_check
    _
  $region3: #{network_forward.1} parent=0 // pred_check_branch
    %13 = sbr.rel (0) target = $region5
  $region4: #{network_forward.1} parent=0 // pred_region
    _
  $region5: #{network_forward.1} parent=0 // pred_fallthru
    _
  // Predicated region
  $region6: #{network_forward.1} parent=0 // pred_check
    _
  $region7: #{network_forward.1} parent=0 // pred_check_branch
    %15 = sbr.rel (0) target = $region9
  $region8: #{network_forward.1} parent=0 // pred_region
    _
  $region9: #{network_forward.1} parent=0 // pred_fallthru
    _
  // Predicated region
  $region10: #{network_forward.1} parent=0 // pred_check
    _
  $region11: #{network_forward.1} parent=0 // pred_check_branch
    %17 = sbr.rel (0) target = $region13
  $region12: #{network_forward.1} parent=0 // pred_region
    _
  $region13: #{network_forward.1} parent=0 // pred_fallthru
    _
  // Predicated region
  $region14: #{network_forward.1} parent=0 // pred_check
    _
  $region15: #{network_forward.1} parent=0 // pred_check_branch
    %19 = sbr.rel (0) target = $region17
  $region16: #{network_forward.1} parent=0 // pred_region
    _
  $region17: #{network_forward.1} parent=0 // pred_fallthru
    _
  // Predicated region
  $region18: #{network_forward.1} parent=0 // pred_check
    _
  $region19: #{network_forward.1} parent=0 // pred_check_branch
    %21 = sbr.rel (0) target = $region21
  $region20: #{network_forward.1} parent=0 // pred_region
    _
  $region21: #{network_forward.1} parent=0 // pred_fallthru
    _
  // Predicated region
  $region22: #{network_forward.1} parent=0 // pred_check
    _
  $region23: #{network_forward.1} parent=0 // pred_check_branch
    %23 = sbr.rel (0) target = $region25
  $region24: #{network_forward.1} parent=0 // pred_region
    _
  $region25: #{network_forward.1} parent=0 // pred_fallthru
    _
  // Predicated region
  $region26: #{network_forward.1} parent=0 // pred_check
    _
  $region27: #{network_forward.1} parent=0 // pred_check_branch
    %25 = sbr.rel (0) target = $region29
  $region28: #{network_forward.1} parent=0 // pred_region
    _
  $region29: #{network_forward.1} parent=0 // pred_fallthru
    _
  %v27 = vld [vmem:[%s0] sm:$0xff]
  %v28 = vpack.c.bf16 %v27, %v27
  %v29 = vld [vmem:[%s1] sm:$0x3]
  %v30 = vld [vmem:[%s2] sm:$0x1]
  %v32 = vlaneseq
  %v33 = vshrl.u32 %v32, 7
  %v34 = vsub.s32 0, %v33
  %v35 = vrot.slane %v30, %v34
  %vm37 = vcmask 31744
  %v39 = vsel %vm37, %v28, 0
  %vm41 = vcmask 1041408
  %v43 = vsel %vm41, %v29, 0
  %45 = vmatprep.subr.bf16.mxu0 0
  %46 = vmatpush1.bf16.msra.mxu0 %v43
  %47 = vmatprep.subr.bf16.mxu0 0
  %48 = vmatpush1.bf16.msra.mxu0 0
  %49 = vmatprep.subr.bf16.mxu0 0
  %50 = vmatpush1.bf16.msra.mxu0 0
  %51 = vmatprep.subr.bf16.mxu0 0
  %52 = vmatpush1.bf16.msra.mxu0 0
  %53 = vmatprep.subr.bf16.mxu0 0
  %54 = vmatpush1.bf16.msra.mxu0 0
  %55 = vmatprep.subr.bf16.mxu0 0
  %56 = vmatpush1.bf16.msra.mxu0 0
  %57 = vmatprep.subr.bf16.mxu0 0
  %58 = vmatpush1.bf16.msra.mxu0 0
  %59 = vmatprep.subr.bf16.mxu0 0
  %60 = vmatpush1.bf16.msra.mxu0 0
  %61 = vmatprep.subr.bf16.mxu0 0
  %62 = vmatpush1.bf16.msra.mxu0 0
  %63 = vmatprep.subr.bf16.mxu0 0
  %64 = vmatpush1.bf16.msra.mxu0 0
  %65 = vmatprep.subr.bf16.mxu0 0
  %66 = vmatpush1.bf16.msra.mxu0 0
  %67 = vmatprep.subr.bf16.mxu0 0
  %68 = vmatpush1.bf16.msra.mxu0 0
  %69 = vmatprep.subr.bf16.mxu0 0
  %70 = vmatpush1.bf16.msra.mxu0 0
  %71 = vmatprep.subr.bf16.mxu0 0
  %72 = vmatpush1.bf16.msra.mxu0 0
  %73 = vmatprep.subr.bf16.mxu0 0
  %74 = vmatpush1.bf16.msra.mxu0 0
  %75 = vmatprep.subr.bf16.mxu0 0
  %76 = vmatpush1.bf16.msra.mxu0 0
  %77 = vmatprep.mubr.bf16.mxu0 0
  %78 = vmatmul.mubr.bf16.gmra.mrb[0].mxu0 %v39
  %v79 = vpop.f32.mrb[0].mxu0
  %v80 = vadd.f32 %v35, %v79
  %v81 = vpop.f32.mrb[0].mxu0
  %v82 = vpop.f32.mrb[0].mxu0
  %v83 = vpop.f32.mrb[0].mxu0
  %84 = vdwg.mxu0
  %v85 = vmax.f32 %v80, -20.0
  %v86 = vmin.f32 %v85, 20.0
  %v87 = vmul.f32 %v86, 1.442695
  %v88 = vpow.pop %v87
  %v89 = vadd.f32 %v88, 2.0
  %v90 = vmul.f32 %v88, %v89
  %v91 = vmul.f32 %v80, %v90
  %v92 = vadd.f32 %v90, 2.0
  %v93 = vrcp.pop %v92
  %v94 = vmul.f32 %v91, %v93
  %v95 = vpack.c.bf16 %v94, %v94
  %v96 = vld [vmem:[%s3] sm:$0xf]
  %v97 = vld [vmem:[%s3 + $0x4] sm:$0xf]
  %v98 = vld [vmem:[%s3 + $0x8] sm:$0xf]
  %v99 = vld [vmem:[%s3 + $0xc] sm:$0xf]
  %v100 = vld [vmem:[%s4] sm:$0x1]
  %v102 = vlaneseq
  %v103 = vshrl.u32 %v102, 7
  %v104 = vsub.s32 0, %v103
  %v105 = vrot.slane %v100, %v104
  %v111 = vunpack.c.l.b16 %v96
  %v112 = vunpack.c.l.b16 %v97
  %v113 = vunpack.c.l.b16 %v98
  %v114 = vunpack.c.l.b16 %v99
  %v115 = vpack.c.b16 %v112, %v111
  %v116 = vpack.c.b16 %v114, %v113
  %vm119 = vcmask 261120
  %v121 = vsel %vm119, %v95, 0
  %123 = vmatprep.subr.bf16.mxu0 0
  %124 = vmatpush1.bf16.msra.mxu0 %v115
  %125 = vmatprep.subr.bf16.mxu0 0
  %126 = vmatpush1.bf16.msra.mxu0 %v116
  %127 = vmatprep.subr.bf16.mxu0 0
  %128 = vmatpush1.bf16.msra.mxu0 0
  %129 = vmatprep.subr.bf16.mxu0 0
  %130 = vmatpush1.bf16.msra.mxu0 0
  %131 = vmatprep.subr.bf16.mxu0 0
  %132 = vmatpush1.bf16.msra.mxu0 0
  %133 = vmatprep.subr.bf16.mxu0 0
  %134 = vmatpush1.bf16.msra.mxu0 0
  %135 = vmatprep.subr.bf16.mxu0 0
  %136 = vmatpush1.bf16.msra.mxu0 0
  %137 = vmatprep.subr.bf16.mxu0 0
  %138 = vmatpush1.bf16.msra.mxu0 0
  %139 = vmatprep.subr.bf16.mxu0 0
  %140 = vmatpush1.bf16.msra.mxu0 0
  %141 = vmatprep.subr.bf16.mxu0 0
  %142 = vmatpush1.bf16.msra.mxu0 0
  %143 = vmatprep.subr.bf16.mxu0 0
  %144 = vmatpush1.bf16.msra.mxu0 0
  %145 = vmatprep.subr.bf16.mxu0 0
  %146 = vmatpush1.bf16.msra.mxu0 0
  %147 = vmatprep.subr.bf16.mxu0 0
  %148 = vmatpush1.bf16.msra.mxu0 0
  %149 = vmatprep.subr.bf16.mxu0 0
  %150 = vmatpush1.bf16.msra.mxu0 0
  %151 = vmatprep.subr.bf16.mxu0 0
  %152 = vmatpush1.bf16.msra.mxu0 0
  %153 = vmatprep.subr.bf16.mxu0 0
  %154 = vmatpush1.bf16.msra.mxu0 0
  %155 = vmatprep.mubr.bf16.mxu0 0
  %156 = vmatmul.mubr.bf16.gmra.mrb[0].mxu0 %v121
  %v157 = vpop.f32.mrb[0].mxu0
  %v158 = vadd.f32 %v105, %v157
  %v159 = vpop.f32.mrb[0].mxu0
  %v160 = vpop.f32.mrb[0].mxu0
  %v161 = vpop.f32.mrb[0].mxu0
  %162 = vdwg.mxu0
  %v163 = vmax.f32 %v158, -20.0
  %v164 = vmin.f32 %v163, 20.0
  %v165 = vmul.f32 %v164, 1.442695
  %v166 = vpow.pop %v165
  %v167 = vadd.f32 %v166, 2.0
  %v168 = vmul.f32 %v166, %v167
  %v169 = vmul.f32 %v158, %v168
  %v170 = vadd.f32 %v168, 2.0
  %v171 = vrcp.pop %v170
  %v172 = vmul.f32 %v169, %v171
  %v173 = vpack.c.bf16 %v172, %v172
  %v174 = vld [vmem:[%s5] sm:$0xf]
  %v175 = vld [vmem:[%s5 + $0x4] sm:$0xf]
  %v176 = vld [vmem:[%s5 + $0x8] sm:$0xf]
  %v177 = vld [vmem:[%s5 + $0xc] sm:$0xf]
  %v178 = vld [vmem:[%s6] sm:$0x1]
  %v180 = vlaneseq
  %v181 = vshrl.u32 %v180, 7
  %v182 = vsub.s32 0, %v181
  %v183 = vrot.slane %v178, %v182
  %v189 = vunpack.c.l.b16 %v174
  %v190 = vunpack.c.l.b16 %v175
  %v191 = vunpack.c.l.b16 %v176
  %v192 = vunpack.c.l.b16 %v177
  %v193 = vpack.c.b16 %v190, %v189
  %v194 = vpack.c.b16 %v192, %v191
  %v198 = vsel %vm119, %v173, 0
  %200 = vmatprep.subr.bf16.mxu0 0
  %201 = vmatpush1.bf16.msra.mxu0 %v193
  %202 = vmatprep.subr.bf16.mxu0 0
  %203 = vmatpush1.bf16.msra.mxu0 %v194
  %204 = vmatprep.subr.bf16.mxu0 0
  %205 = vmatpush1.bf16.msra.mxu0 0
  %206 = vmatprep.subr.bf16.mxu0 0
  %207 = vmatpush1.bf16.msra.mxu0 0
  %208 = vmatprep.subr.bf16.mxu0 0
  %209 = vmatpush1.bf16.msra.mxu0 0
  %210 = vmatprep.subr.bf16.mxu0 0
  %211 = vmatpush1.bf16.msra.mxu0 0
  %212 = vmatprep.subr.bf16.mxu0 0
  %213 = vmatpush1.bf16.msra.mxu0 0
  %214 = vmatprep.subr.bf16.mxu0 0
  %215 = vmatpush1.bf16.msra.mxu0 0
  %216 = vmatprep.subr.bf16.mxu0 0
  %217 = vmatpush1.bf16.msra.mxu0 0
  %218 = vmatprep.subr.bf16.mxu0 0
  %219 = vmatpush1.bf16.msra.mxu0 0
  %220 = vmatprep.subr.bf16.mxu0 0
  %221 = vmatpush1.bf16.msra.mxu0 0
  %222 = vmatprep.subr.bf16.mxu0 0
  %223 = vmatpush1.bf16.msra.mxu0 0
  %224 = vmatprep.subr.bf16.mxu0 0
  %225 = vmatpush1.bf16.msra.mxu0 0
  %226 = vmatprep.subr.bf16.mxu0 0
  %227 = vmatpush1.bf16.msra.mxu0 0
  %228 = vmatprep.subr.bf16.mxu0 0
  %229 = vmatpush1.bf16.msra.mxu0 0
  %230 = vmatprep.subr.bf16.mxu0 0
  %231 = vmatpush1.bf16.msra.mxu0 0
  %232 = vmatprep.mubr.bf16.mxu0 0
  %233 = vmatmul.mubr.bf16.gmra.mrb[0].mxu0 %v198
  %v234 = vpop.f32.mrb[0].mxu0
  %v235 = vadd.f32 %v183, %v234
  %v236 = vpop.f32.mrb[0].mxu0
  %v237 = vpop.f32.mrb[0].mxu0
  %v238 = vpop.f32.mrb[0].mxu0
  %239 = vdwg.mxu0
  %240 = vst [vmem:[%s7] sm:$0xff] %v235
  // Predicated region
  $region30: #{network_forward.1} parent=0 // pred_check
    _
  $region31: #{network_forward.1} parent=0 // pred_check_branch
    %242 = sbr.rel (0) target = $region33
  $region32: #{network_forward.1} parent=0 // pred_region
    _
  $region33: #{network_forward.1} parent=0 // pred_fallthru
    _
  // Predicated region
  $region34: #{network_forward.1} parent=0 // pred_check
    _
  $region35: #{network_forward.1} parent=0 // pred_check_branch
    %244 = sbr.rel (0) target = $region37
  $region36: #{network_forward.1} parent=0 // pred_region
    _
  $region37: #{network_forward.1} parent=0 // pred_fallthru
    _

</llo_original>
